<compile_context>
chip_gen: v7x
topology: tpu7x:2x2x1
jax: 0.10.0
libtpu: 0.0.40
codegen_flags: <defaults>
</compile_context>

<pallas_src>
import math

import jax
import jax.numpy as jnp
from jax import lax
from jax.experimental import pallas as pl
from jax.experimental.pallas import tpu as pltpu


_ISSUE_UNROLL = 8  # rows issued per inner-loop trip (tb is a multiple of 8)


def _round_up(x, m):
    return (x + m - 1) // m * m


# ---------------------------------------------------------------------------
# VMEM fast path: whole table resident in VMEM, in-kernel dynamic-slice gather.
# ---------------------------------------------------------------------------
def _embed_gather_vmem_kernel(ids_ref, table_ref, out_ref):
    # ids_ref:   (n_padded,) int32 token ids in SMEM (scalar prefetch)
    # table_ref: (V, D) table block, resident in VMEM (constant index_map)
    # out_ref:   (TB, D) output block for this grid step
    i = pl.program_id(0)
    tb = out_ref.shape[0]
    base = pl.multiple_of(i * tb, tb)

    def body(k, carry):
        off = pl.multiple_of(k * _ISSUE_UNROLL, _ISSUE_UNROLL)
        for u in range(_ISSUE_UNROLL):  # manual 8-wide unroll
            row = ids_ref[base + off + u]
            out_ref[pl.ds(off + u, 1), :] = table_ref[pl.ds(row, 1), :]
        return carry

    lax.fori_loop(0, tb // _ISSUE_UNROLL, body, 0)


# ---------------------------------------------------------------------------
# HBM gather path: DMA row gather with cross-step double-buffered staging.
# ---------------------------------------------------------------------------
def _embed_gather_hbm_kernel(ids_ref, table_hbm, out_ref, rows_vmem, sem):
    # ids_ref:   (n_padded,) int32 token ids in SMEM (scalar prefetch)
    # table_hbm: (V, D) embedding table, left in HBM (pl.ANY)
    # out_ref:   (TB, D) output block for this grid step (VMEM)
    # rows_vmem: (2, TB, D) double-buffered staging for gathered rows
    # sem:       (2,) DMA semaphores, one per staging slot
    split = pl.program_id(0)          # "parallel" axis (v7x: one per TC)
    j = pl.program_id(1)              # "arbitrary" axis (sequential per core)
    nblk = pl.num_programs(1)
    tb = out_ref.shape[0]

    cur_blk = split * nblk + j        # global token-block index
    slot = j % 2

    def issue_block(block_idx, slot_idx):
        base = pl.multiple_of(block_idx * tb, tb)

        def body(k, carry):
            off = pl.multiple_of(k * _ISSUE_UNROLL, _ISSUE_UNROLL)
            for u in range(_ISSUE_UNROLL):  # manual 8-wide unroll
                row = ids_ref[base + off + u]
                pltpu.make_async_copy(
                    table_hbm.at[pl.ds(row, 1), :],
                    rows_vmem.at[slot_idx, pl.ds(off + u, 1), :],
                    sem.at[slot_idx],
                ).start()
            return carry

        lax.fori_loop(0, tb // _ISSUE_UNROLL, body, 0)

    # Prime the pipeline for the first block of this core's range.
    @pl.when(j == 0)
    def _():
        issue_block(cur_blk, slot)

    # Aggregate wait: DMA semaphores are size-accounted, so one descriptor
    # covering the whole (TB, D) slot waits for the sum of the TB row copies
    # (src ref is only used for sizing; same idiom as ragged paged attention).
    pltpu.make_async_copy(
        rows_vmem.at[slot], rows_vmem.at[slot], sem.at[slot]
    ).wait()

    # Prefetch the *next* block's rows into the other slot while this block's
    # store + HBM writeback proceed (ids are already in SMEM). Guarded so no
    # DMA is left un-waited at the end of this core's range.
    @pl.when(j + 1 < nblk)
    def _():
        issue_block(cur_blk + 1, 1 - slot)

    # Lane-dense (TB, D) store; the pipeline overlaps this block's writeback
    # with the already-issued gathers of the next block.
    out_ref[...] = rows_vmem[slot]


# ---------------------------------------------------------------------------
# Wrapper
# ---------------------------------------------------------------------------
def embedder_forward(x, table, *, token_block=512,
                     vmem_table_bytes_limit=8 * 1024 * 1024):
    """Equivalent to torch.nn.Embedding(vocab, d_model)(x) with `table` as weight.

    x: integer token ids of any shape; table: (vocab, d_model) float weights.
    Returns an array of shape x.shape + (d_model,) with table.dtype.
    """
    lead_shape = tuple(x.shape)
    n = int(math.prod(lead_shape)) if lead_shape else 1
    vocab, d_model = table.shape
    itemsize = jnp.dtype(table.dtype).itemsize
    table_bytes = vocab * d_model * itemsize

    use_vmem_table = table_bytes <= vmem_table_bytes_limit

    # ---- token-block (tb) selection -------------------------------------
    tb = min(token_block, _round_up(n, 8))
    tb = max(8, _round_up(tb, 8))
    # Keep >= ~8 grid steps when the problem allows (pipelining / 2-TC split).
    while pl.cdiv(n, tb) < 8 and tb > 128:
        tb = max(8, _round_up(tb // 2, 8))
    # VMEM cap: 2 staging slots + 2 pipelined out blocks (+ resident table).
    block_budget = (24 << 20) - (2 * table_bytes if use_vmem_table else 0)
    block_budget = max(block_budget, 2 << 20)
    while tb > 8 and 4 * tb * d_model * itemsize > block_budget:
        tb = max(8, _round_up(tb // 2, 8))
    # Prefer a tb that divides n: avoids the padded tail (wasted row-0
    # gathers) and the post-kernel out[:n] copy.
    if n % tb != 0:
        for cand in range(tb, max(tb // 2, 8) - 1, -8):
            if n % cand == 0:
                tb = cand
                break

    num_blocks = pl.cdiv(n, tb)
    # Explicit 2-way core split (v7x) only when it costs no extra padding.
    if (not use_vmem_table) and num_blocks >= 8 and num_blocks % 2 == 0:
        n_splits = 2
    else:
        n_splits = 1
    blocks_per_split = pl.cdiv(num_blocks, n_splits)
    num_blocks = blocks_per_split * n_splits
    n_padded = num_blocks * tb

    ids_flat = x.reshape(n).astype(jnp.int32)
    if n_padded != n:
        ids_flat = jnp.pad(ids_flat, (0, n_padded - n))  # pad slots read row 0

    bytes_accessed = 2 * n_padded * d_model * itemsize + n_padded * 4
    if use_vmem_table:
        bytes_accessed += table_bytes

    if use_vmem_table:
        grid_spec = pltpu.PrefetchScalarGridSpec(
            num_scalar_prefetch=1,                      # ids land in SMEM
            grid=(num_blocks,),
            in_specs=[
                # Full table, constant block index -> fetched once, stays in VMEM.
                pl.BlockSpec((vocab, d_model), lambda i, ids: (0, 0)),
            ],
            out_specs=pl.BlockSpec((tb, d_model), lambda i, ids: (i, 0)),
        )
        kernel = _embed_gather_vmem_kernel
        dim_sem = ("parallel",)
        vmem_needed = 2 * table_bytes + 2 * tb * d_model * itemsize
    else:
        grid_spec = pltpu.PrefetchScalarGridSpec(
            num_scalar_prefetch=1,                      # ids land in SMEM
            grid=(n_splits, blocks_per_split),
            in_specs=[
                # Table stays in HBM; rows are DMA-gathered manually.
                pl.BlockSpec(memory_space=pl.ANY),
            ],
            out_specs=pl.BlockSpec(
                (tb, d_model),
                lambda s, j, ids: (s * blocks_per_split + j, 0)),
            scratch_shapes=[
                pltpu.VMEM((2, tb, d_model), table.dtype),   # double buffer
                pltpu.SemaphoreType.DMA((2,)),               # one sem per slot
            ],
        )
        kernel = _embed_gather_hbm_kernel
        dim_sem = ("parallel", "arbitrary")
        vmem_needed = 4 * tb * d_model * itemsize

    vmem_limit = int(min(vmem_needed + (8 << 20), 48 << 20))

    out = pl.pallas_call(
        kernel,
        out_shape=jax.ShapeDtypeStruct((n_padded, d_model), table.dtype),
        grid_spec=grid_spec,
        compiler_params=pltpu.CompilerParams(
            dimension_semantics=dim_sem,
            vmem_limit_bytes=vmem_limit,
        ),
        cost_estimate=pl.CostEstimate(
            flops=0, transcendentals=0, bytes_accessed=int(bytes_accessed)),
    )(ids_flat, table)

    if n_padded != n:
        out = out[:n]
    return out.reshape(*lead_shape, d_model)


if __name__ == "__main__":
    vocab_size = 256
    d_model = 128
    batch, seq = 2, 8

    key = jax.random.PRNGKey(0)
    k_tab, k_ids = jax.random.split(key)

    # nn.Embedding default init: weight ~ N(0, 1)
    table = jax.random.normal(k_tab, (vocab_size, d_model), dtype=jnp.float32)
    x = jax.random.randint(k_ids, (batch, seq), 0, vocab_size, dtype=jnp.int32)

    ref = table[x]  # plain-JAX gather == torch.nn.Embedding forward

    # Small-table fast path (table resident in VMEM).
    out_fast = jax.block_until_ready(embedder_forward(x, table))
    assert out_fast.shape == (batch, seq, d_model)
    assert jnp.array_equal(out_fast, ref), "VMEM fast path mismatch"

    # Large-table path, forced: HBM table + double-buffered DMA row gather.
    out_hbm = jax.block_until_ready(
        embedder_forward(x, table, vmem_table_bytes_limit=0))
    assert out_hbm.shape == (batch, seq, d_model)
    assert jnp.array_equal(out_hbm, ref), "HBM gather path mismatch"

    print("KERNEL_OK")
</pallas_src>

<mosaic_0001>
module attributes {stable_mosaic.version = 11 : i64} {
  func.func @_embed_gather_vmem_kernel(%arg0: i32, %arg1: memref<16xi32, #tpu.memory_space<smem>>, %arg2: memref<256x128xf32, #tpu.memory_space<vmem>>, %arg3: memref<16x128xf32, #tpu.memory_space<vmem>>) attributes {dimension_semantics = [#tpu.dimension_semantics<parallel>], iteration_bounds = array<i64: 1>, scalar_prefetch = 1 : i64, scratch_operands = 0 : i64, tpu.core_type = #tpu.core_type<tc>, window_params = [{pipeline_mode = #tpu.pipeline_mode<synchronous>, transform_indices = @transform_0, window_bounds = array<i64: 256, 128>}, {transform_indices = @transform_1, window_bounds = array<i64: 16, 128>}]} {
    %c16_i32 = arith.constant 16 : i32
    %0 = arith.muli %arg0, %c16_i32 : i32
    %1 = tpu.assume_multiple %0, 16 : i32
    %c0_i32 = arith.constant 0 : i32
    %c2_i32 = arith.constant 2 : i32
    %2 = arith.addi %c0_i32, %c2_i32 : i32
    %c1_i32 = arith.constant 1 : i32
    scf.for %arg4 = %c0_i32 to %2 step %c1_i32  : i32 {
      %c8_i32 = arith.constant 8 : i32
      %3 = arith.muli %arg4, %c8_i32 : i32
      %4 = tpu.assume_multiple %3, 8 : i32
      %5 = arith.addi %1, %4 : i32
      %c0_i32_1 = arith.constant 0 : i32
      %6 = arith.addi %5, %c0_i32_1 : i32
      %7 = arith.index_cast %6 : i32 to index
      %8 = memref.load %arg1[%7] : memref<16xi32, #tpu.memory_space<smem>>
      %9 = arith.index_cast %8 : i32 to index
      %c0 = arith.constant 0 : index
      %10 = vector.load %arg2[%9, %c0] : memref<256x128xf32, #tpu.memory_space<vmem>>, vector<1x128xf32>
      %c0_i32_2 = arith.constant 0 : i32
      %11 = arith.addi %4, %c0_i32_2 : i32
      %12 = arith.index_cast %11 : i32 to index
      %c0_3 = arith.constant 0 : index
      %13 = vector.load %arg3[%12, %c0_3] : memref<16x128xf32, #tpu.memory_space<vmem>>, vector<1x128xf32>
      tpu.vector_store %arg3[%12, %c0_3], %10 {strides = array<i32>} : memref<16x128xf32, #tpu.memory_space<vmem>>, vector<1x128xf32>,
      %14 = arith.addi %1, %4 : i32
      %c1_i32_4 = arith.constant 1 : i32
      %15 = arith.addi %14, %c1_i32_4 : i32
      %16 = arith.index_cast %15 : i32 to index
      %17 = memref.load %arg1[%16] : memref<16xi32, #tpu.memory_space<smem>>
      %18 = arith.index_cast %17 : i32 to index
      %c0_5 = arith.constant 0 : index
      %19 = vector.load %arg2[%18, %c0_5] : memref<256x128xf32, #tpu.memory_space<vmem>>, vector<1x128xf32>
      %c1_i32_6 = arith.constant 1 : i32
      %20 = arith.addi %4, %c1_i32_6 : i32
      %21 = arith.index_cast %20 : i32 to index
      %c0_7 = arith.constant 0 : index
      %22 = vector.load %arg3[%21, %c0_7] : memref<16x128xf32, #tpu.memory_space<vmem>>, vector<1x128xf32>
      tpu.vector_store %arg3[%21, %c0_7], %19 {strides = array<i32>} : memref<16x128xf32, #tpu.memory_space<vmem>>, vector<1x128xf32>,
      %23 = arith.addi %1, %4 : i32
      %c2_i32_8 = arith.constant 2 : i32
      %24 = arith.addi %23, %c2_i32_8 : i32
      %25 = arith.index_cast %24 : i32 to index
      %26 = memref.load %arg1[%25] : memref<16xi32, #tpu.memory_space<smem>>
      %27 = arith.index_cast %26 : i32 to index
      %c0_9 = arith.constant 0 : index
      %28 = vector.load %arg2[%27, %c0_9] : memref<256x128xf32, #tpu.memory_space<vmem>>, vector<1x128xf32>
      %c2_i32_10 = arith.constant 2 : i32
      %29 = arith.addi %4, %c2_i32_10 : i32
      %30 = arith.index_cast %29 : i32 to index
      %c0_11 = arith.constant 0 : index
      %31 = vector.load %arg3[%30, %c0_11] : memref<16x128xf32, #tpu.memory_space<vmem>>, vector<1x128xf32>
      tpu.vector_store %arg3[%30, %c0_11], %28 {strides = array<i32>} : memref<16x128xf32, #tpu.memory_space<vmem>>, vector<1x128xf32>,
      %32 = arith.addi %1, %4 : i32
      %c3_i32 = arith.constant 3 : i32
      %33 = arith.addi %32, %c3_i32 : i32
      %34 = arith.index_cast %33 : i32 to index
      %35 = memref.load %arg1[%34] : memref<16xi32, #tpu.memory_space<smem>>
      %36 = arith.index_cast %35 : i32 to index
      %c0_12 = arith.constant 0 : index
      %37 = vector.load %arg2[%36, %c0_12] : memref<256x128xf32, #tpu.memory_space<vmem>>, vector<1x128xf32>
      %c3_i32_13 = arith.constant 3 : i32
      %38 = arith.addi %4, %c3_i32_13 : i32
      %39 = arith.index_cast %38 : i32 to index
      %c0_14 = arith.constant 0 : index
      %40 = vector.load %arg3[%39, %c0_14] : memref<16x128xf32, #tpu.memory_space<vmem>>, vector<1x128xf32>
      tpu.vector_store %arg3[%39, %c0_14], %37 {strides = array<i32>} : memref<16x128xf32, #tpu.memory_space<vmem>>, vector<1x128xf32>,
      %41 = arith.addi %1, %4 : i32
      %c4_i32 = arith.constant 4 : i32
      %42 = arith.addi %41, %c4_i32 : i32
      %43 = arith.index_cast %42 : i32 to index
      %44 = memref.load %arg1[%43] : memref<16xi32, #tpu.memory_space<smem>>
      %45 = arith.index_cast %44 : i32 to index
      %c0_15 = arith.constant 0 : index
      %46 = vector.load %arg2[%45, %c0_15] : memref<256x128xf32, #tpu.memory_space<vmem>>, vector<1x128xf32>
      %c4_i32_16 = arith.constant 4 : i32
      %47 = arith.addi %4, %c4_i32_16 : i32
      %48 = arith.index_cast %47 : i32 to index
      %c0_17 = arith.constant 0 : index
      %49 = vector.load %arg3[%48, %c0_17] : memref<16x128xf32, #tpu.memory_space<vmem>>, vector<1x128xf32>
      tpu.vector_store %arg3[%48, %c0_17], %46 {strides = array<i32>} : memref<16x128xf32, #tpu.memory_space<vmem>>, vector<1x128xf32>,
      %50 = arith.addi %1, %4 : i32
      %c5_i32 = arith.constant 5 : i32
      %51 = arith.addi %50, %c5_i32 : i32
      %52 = arith.index_cast %51 : i32 to index
      %53 = memref.load %arg1[%52] : memref<16xi32, #tpu.memory_space<smem>>
      %54 = arith.index_cast %53 : i32 to index
      %c0_18 = arith.constant 0 : index
      %55 = vector.load %arg2[%54, %c0_18] : memref<256x128xf32, #tpu.memory_space<vmem>>, vector<1x128xf32>
      %c5_i32_19 = arith.constant 5 : i32
      %56 = arith.addi %4, %c5_i32_19 : i32
      %57 = arith.index_cast %56 : i32 to index
      %c0_20 = arith.constant 0 : index
      %58 = vector.load %arg3[%57, %c0_20] : memref<16x128xf32, #tpu.memory_space<vmem>>, vector<1x128xf32>
      tpu.vector_store %arg3[%57, %c0_20], %55 {strides = array<i32>} : memref<16x128xf32, #tpu.memory_space<vmem>>, vector<1x128xf32>,
      %59 = arith.addi %1, %4 : i32
      %c6_i32 = arith.constant 6 : i32
      %60 = arith.addi %59, %c6_i32 : i32
      %61 = arith.index_cast %60 : i32 to index
      %62 = memref.load %arg1[%61] : memref<16xi32, #tpu.memory_space<smem>>
      %63 = arith.index_cast %62 : i32 to index
      %c0_21 = arith.constant 0 : index
      %64 = vector.load %arg2[%63, %c0_21] : memref<256x128xf32, #tpu.memory_space<vmem>>, vector<1x128xf32>
      %c6_i32_22 = arith.constant 6 : i32
      %65 = arith.addi %4, %c6_i32_22 : i32
      %66 = arith.index_cast %65 : i32 to index
      %c0_23 = arith.constant 0 : index
      %67 = vector.load %arg3[%66, %c0_23] : memref<16x128xf32, #tpu.memory_space<vmem>>, vector<1x128xf32>
      tpu.vector_store %arg3[%66, %c0_23], %64 {strides = array<i32>} : memref<16x128xf32, #tpu.memory_space<vmem>>, vector<1x128xf32>,
      %68 = arith.addi %1, %4 : i32
      %c7_i32 = arith.constant 7 : i32
      %69 = arith.addi %68, %c7_i32 : i32
      %70 = arith.index_cast %69 : i32 to index
      %71 = memref.load %arg1[%70] : memref<16xi32, #tpu.memory_space<smem>>
      %72 = arith.index_cast %71 : i32 to index
      %c0_24 = arith.constant 0 : index
      %73 = vector.load %arg2[%72, %c0_24] : memref<256x128xf32, #tpu.memory_space<vmem>>, vector<1x128xf32>
      %c7_i32_25 = arith.constant 7 : i32
      %74 = arith.addi %4, %c7_i32_25 : i32
      %75 = arith.index_cast %74 : i32 to index
      %c0_26 = arith.constant 0 : index
      %76 = vector.load %arg3[%75, %c0_26] : memref<16x128xf32, #tpu.memory_space<vmem>>, vector<1x128xf32>
      tpu.vector_store %arg3[%75, %c0_26], %73 {strides = array<i32>} : memref<16x128xf32, #tpu.memory_space<vmem>>, vector<1x128xf32>,
    }
    %c2_i32_0 = arith.constant 2 : i32
    return
  }
  func.func @transform_0(%arg0: i32, %arg1: memref<16xi32, #tpu.memory_space<smem>>) -> (i32, i32) {
    %c0_i32 = arith.constant 0 : i32
    %c0_i32_0 = arith.constant 0 : i32
    %c0_i32_1 = arith.constant 0 : i32
    return %c0_i32, %c0_i32_0 : i32, i32
  }
  func.func @transform_1(%arg0: i32, %arg1: memref<16xi32, #tpu.memory_space<smem>>) -> (i32, i32) {
    %c0_i32 = arith.constant 0 : i32
    %c0_i32_0 = arith.constant 0 : i32
    return %arg0, %c0_i32 : i32, i32
  }
}

</mosaic_0001>

<llo_original>
// kernel: tpu_custom_call.1
$region0: #{tpu_custom_call.1}
  #allocation0 [shape = 'u32[]', space=smem, size = 0x4, offset = 0x4, fixed_abs, tag = 'smem constant byte address 0x4 - core index']
  #allocation1 [shape = 'u32[144,128]{1,0:T(1,128)}', space=vmem, size = 0x12000, scoped, tag = 'internal scratch']
  #allocation2 [shape = 's32[1]{0}', space=sflag, size = 0x4, scoped, tag = 'scoped memory for tpu_custom_call.1']
  #allocation3 [shape = 'u8[512]{0}', space=smem, size = 0x200, scoped, tag = 'prefetched SMEM operand 0']
  %s0 = inlined_call_operand.hbm [shape: s32[16], index: 0, kind: input, shape index: {}]
  %s1 = inlined_call_operand.hbm [shape: f32[256,128], index: 1, kind: input, shape index: {}]
  %s2 = inlined_call_operand.hbm [shape: f32[16,128], index: 2, kind: output, shape index: {}]
  %s3 = sld [smem:[#allocation0]]
  $region25: #{tpu_custom_call.1} parent=0
    _
  %s5 = ssub.s32 1, %s3
  %s6 = scalar_select 0, %s5, %s3
  %8 = dma.hbm_to_smem %s0, 16, [#allocation3], [#allocation2]
  %9 = dma.done [#allocation2], 16
  %10 = sfence
  $region1: #{tpu_custom_call.1} parent=0
    #allocation4 [shape = 'u8[131072]{0}', space=vmem, size = 0x20000, scoped, tag = 'input window, operand 1, single buffered']
    #allocation5 [shape = 's32[1]{0}', space=sflag, size = 0x4, scoped, tag = 'scoped memory for tpu_custom_call.1']
    #allocation6 [shape = 's32[1]{0}', space=sflag, size = 0x4, scoped, tag = 'scoped memory for tpu_custom_call.1']
    #allocation7 [shape = 'u8[8192]{0}', space=vmem, size = 0x2000, scoped, tag = 'output window, operand 0, single buffered']
    %11 = vsyncpa [#allocation5], 0
    %12 = vsyncpa [#allocation6], 0
    // Predicated region
    $region2: #{tpu_custom_call.1} parent=1 // pred_check
      _
    $region3: #{tpu_custom_call.1} parent=1 // pred_check_branch
      %14 = sbr.rel (0) target = $region5
    $region4: #{tpu_custom_call.1} parent=1 // pred_region
      %s16 = ssub.s32 4096, 4096
      %17 = vsyncadd [#allocation5], %s16
      %s18 = sshll.u32 [#allocation4], 4
      %s19 = int_to_ptr.vmem [resolvable:$true] %s18
      %24 = dma.hbm_to_vmem [thread:$0]  %s1, 4096, %s19, [#allocation5], 128, 128, 8
    $region5: #{tpu_custom_call.1} parent=1 // pred_fallthru
      _
    // Predicated region
    $region6: #{tpu_custom_call.1} parent=1 // pred_check
      _
    $region7: #{tpu_custom_call.1} parent=1 // pred_check_branch
      %26 = sbr.rel (0) target = $region9
    $region8: #{tpu_custom_call.1} parent=1 // pred_region
      %27 = dma.done [#allocation5], 4096
    $region9: #{tpu_custom_call.1} parent=1 // pred_fallthru
      _
    %s28 = smul.u32 0, 16
    loop: start=0, step=1, limit=2
    $region10: #{tpu_custom_call.1} parent=1 // loop_pre_header
      _
    $region11: #{tpu_custom_call.1} parent=1 // loop_header
      %s30 = sphi 0, %s34
      %p31 = scmp.ge.s32.totalorder %s30, 2
    $region12: #{tpu_custom_call.1} parent=1 // loop_header_branch
      %33 = sbr.rel (%p31) target = $region16
    $region13: #{tpu_custom_call.1} parent=1 // loop_body
      %s35 = smul.u32 %s30, 8
      %s36 = sadd.s32 %s28, %s35
      %s37 = sld [smem:[#allocation3 + %s36]]
      %s38 = scalar_lea.vmem [#allocation4], %s37
      %v39 = vld [vmem:[%s38] sm:$0x1]
      %s40 = scalar_lea.vmem [#allocation7], %s35
      %41 = vst [vmem:[%s40] sm:$0x1] %v39
      %s42 = sadd.s32 %s36, 1
      %s43 = sld [smem:[#allocation3 + %s42]]
      %s44 = scalar_lea.vmem [#allocation4], %s43
      %v45 = vld [vmem:[%s44] sm:$0x1]
      %s46 = sadd.s32 %s35, 1
      %s47 = scalar_lea.vmem [#allocation7], %s46
      %48 = vst [vmem:[%s47] sm:$0x1] %v45
      %s49 = sadd.s32 %s36, 2
      %s50 = sld [smem:[#allocation3 + %s49]]
      %s51 = scalar_lea.vmem [#allocation4], %s50
      %v52 = vld [vmem:[%s51] sm:$0x1]
      %s53 = sadd.s32 %s35, 2
      %s54 = scalar_lea.vmem [#allocation7], %s53
      %55 = vst [vmem:[%s54] sm:$0x1] %v52
      %s56 = sadd.s32 %s36, 3
      %s57 = sld [smem:[#allocation3 + %s56]]
      %s58 = scalar_lea.vmem [#allocation4], %s57
      %v59 = vld [vmem:[%s58] sm:$0x1]
      %s60 = sadd.s32 %s35, 3
      %s61 = scalar_lea.vmem [#allocation7], %s60
      %62 = vst [vmem:[%s61] sm:$0x1] %v59
      %s63 = sadd.s32 %s36, 4
      %s64 = sld [smem:[#allocation3 + %s63]]
      %s65 = scalar_lea.vmem [#allocation4], %s64
      %v66 = vld [vmem:[%s65] sm:$0x1]
      %s67 = sadd.s32 %s35, 4
      %s68 = scalar_lea.vmem [#allocation7], %s67
      %69 = vst [vmem:[%s68] sm:$0x1] %v66
      %s70 = sadd.s32 %s36, 5
      %s71 = sld [smem:[#allocation3 + %s70]]
      %s72 = scalar_lea.vmem [#allocation4], %s71
      %v73 = vld [vmem:[%s72] sm:$0x1]
      %s74 = sadd.s32 %s35, 5
      %s75 = scalar_lea.vmem [#allocation7], %s74
      %76 = vst [vmem:[%s75] sm:$0x1] %v73
      %s77 = sadd.s32 %s36, 6
      %s78 = sld [smem:[#allocation3 + %s77]]
      %s79 = scalar_lea.vmem [#allocation4], %s78
      %v80 = vld [vmem:[%s79] sm:$0x1]
      %s81 = sadd.s32 %s35, 6
      %s82 = scalar_lea.vmem [#allocation7], %s81
      %83 = vst [vmem:[%s82] sm:$0x1] %v80
      %s84 = sadd.s32 %s36, 7
      %s85 = sld [smem:[#allocation3 + %s84]]
      %s86 = scalar_lea.vmem [#allocation4], %s85
      %v87 = vld [vmem:[%s86] sm:$0x1]
      %s88 = sadd.s32 %s35, 7
      %s89 = scalar_lea.vmem [#allocation7], %s88
      %90 = vst [vmem:[%s89] sm:$0x1] %v87
    $region14: #{tpu_custom_call.1} parent=1 // loop_footer
      %s34 = sadd.s32 1, %s30
    $region15: #{tpu_custom_call.1} parent=1 // loop_footer_branch
      %29 = sbr.rel target = $region11
    $region16: #{tpu_custom_call.1} parent=1 // loop_exit
      _
    // Predicated region
    $region17: #{tpu_custom_call.1} parent=1 // pred_check
      _
    $region18: #{tpu_custom_call.1} parent=1 // pred_check_branch
      %92 = sbr.rel (0) target = $region20
    $region19: #{tpu_custom_call.1} parent=1 // pred_region
      %s94 = ssub.s32 256, 256
      %95 = vsyncadd [#allocation6], %s94
      %s96 = sshll.u32 [#allocation7], 4
      %s97 = int_to_ptr.vmem [resolvable:$true] %s96
      %102 = dma.vmem_to_hbm [thread:$0]  %s97, 256, %s2, [#allocation6], 128, 128, 8
    $region20: #{tpu_custom_call.1} parent=1 // pred_fallthru
      _
    // Predicated region
    $region21: #{tpu_custom_call.1} parent=1 // pred_check
      _
    $region22: #{tpu_custom_call.1} parent=1 // pred_check_branch
      %104 = sbr.rel (0) target = $region24
    $region23: #{tpu_custom_call.1} parent=1 // pred_region
      %105 = dma.done [#allocation6], 256
    $region24: #{tpu_custom_call.1} parent=1 // pred_fallthru
      _
    %106 = vsyncpa [#allocation5], 1
    %107 = vsyncpa [#allocation6], 1

</llo_original>
